<compile_context>
chip_gen: v7x
topology: tpu7x:2x2x1
jax: 0.10.0
libtpu: 0.0.40
codegen_flags: <defaults>
</compile_context>

<pallas_src>
import functools

import jax
import jax.numpy as jnp
from jax.experimental import pallas as pl
from jax.experimental.pallas import tpu as pltpu


def _ada_rmsnorm_kernel(x_ref, gamma_ref, beta_ref, o_ref, *, eps):
    # x_ref:     (1, TN, Dp)  one (batch, seq-tile) block, native dtype
    # gamma_ref: (1, 1, Dp)   per-batch adaptive scale, pre-multiplied by sqrt(D), x.dtype
    # beta_ref:  (1, 1, Dp)   per-batch adaptive shift, x.dtype
    x = x_ref[...]

    # Sum-of-squares + rsqrt in f32 (EUP); zero-padded lanes contribute nothing.
    xf = x.astype(jnp.float32)
    sumsq = jnp.sum(xf * xf, axis=-1, keepdims=True)                 # (1, TN, 1)
    inv = jax.lax.rsqrt(jnp.maximum(sumsq, eps * eps))               # == 1/max(||x||, eps)

    # Affine tail in the input dtype (bf16 VALU on v6e/v7x, f32 otherwise).
    # Note: when N % TN != 0 the padded tail rows hold unspecified data; the
    # corresponding output writes are masked, results are unaffected.
    gamma = gamma_ref[...]                                           # (1, 1, Dp)
    beta = beta_ref[...]                                             # (1, 1, Dp)
    o_ref[...] = ((x * inv.astype(x.dtype)) * gamma + beta).astype(o_ref.dtype)


def _vmem_limit_bytes():
    """Scoped VMEM limit ~= half the chip's physical per-core VMEM.

    v5e/v6e (128 MiB) -> 64 MiB; v7x (64 MiB) -> 32 MiB; conservative fallback.
    """
    try:
        cap = int(pltpu.get_tpu_info().vmem_capacity_bytes)
    except Exception:
        cap = 64 * 1024 * 1024
    return max(16 * 1024 * 1024, min(cap // 2, 64 * 1024 * 1024))


def _pick_block_n(N, Dp, itemsize, target_bytes):
    """Largest seq-tile (multiple of 8, or == N) with one tile <= target_bytes."""
    bn = max(1, target_bytes // max(1, Dp * itemsize))
    bn = min(bn, N)
    if bn < N:
        bn = max(8, (bn // 8) * 8)  # second-minor block dim: multiple of 8 (or full N)
    return int(bn)


def adaptive_rmsnorm(x, cond, wg, bg, wb, bb, *, eps=1e-12, block_n=None):
    """x: (B, N, D), cond: (B, C), wg/wb: (C, D) (== W^T of nn.Linear), bg/bb: (D,)."""
    B, N, D = x.shape
    scale = float(D) ** 0.5

    # Hoisted adaptive affine: one well-shaped XLA GEMM (not a degenerate
    # (1,C)x(C,D) matmul inside the kernel). sqrt(D) is folded into gamma, and
    # both are emitted in x.dtype so the kernel's tail stays in that dtype.
    cond_f = cond.astype(jnp.float32)
    w_cat = jnp.concatenate([wg.astype(jnp.float32), wb.astype(jnp.float32)], axis=-1)
    b_cat = jnp.concatenate([bg.astype(jnp.float32), bb.astype(jnp.float32)], axis=-1)
    gb = cond_f @ w_cat + b_cat                          # (B, 2D), f32
    gamma = (gb[:, :D] * scale).astype(x.dtype)          # (B, D), pre-scaled by sqrt(D)
    beta = gb[:, D:].astype(x.dtype)                     # (B, D)

    # Lane-dense last dim: zero-pad D up to a multiple of 128. Zero pads add
    # nothing to sumsq and produce zero output lanes (0*inv*0 + 0), sliced off.
    Dp = -(-D // 128) * 128
    if Dp != D:
        xp = jnp.pad(x, ((0, 0), (0, 0), (0, Dp - D)))
        gamma = jnp.pad(gamma, ((0, 0), (0, Dp - D)))
        beta = jnp.pad(beta, ((0, 0), (0, Dp - D)))
    else:
        xp = x
    gamma = gamma[:, None, :]                            # (B, 1, Dp)
    beta = beta[:, None, :]                              # (B, 1, Dp)

    # Honest VMEM budget: 2x double-buffered x tile + 2x out tile + whole-tile
    # f32 temporaries (sumsq upcast) -> budget ~8 tile-equivalents.
    vmem_limit = _vmem_limit_bytes()
    itemsize = jnp.dtype(x.dtype).itemsize
    target_bytes = max(512 * 1024, vmem_limit // 8)

    if block_n is None:
        block_n = _pick_block_n(N, Dp, itemsize, target_bytes)
    n_tiles = pl.cdiv(N, block_n)

    # Megacore (v7x has 2 TCs): ensure a "parallel" axis has >= 2 steps.
    if B == 1 and n_tiles < 2 and N >= 16:
        block_n = max(8, (((N + 1) // 2 + 7) // 8) * 8)
        n_tiles = pl.cdiv(N, block_n)

    kernel = functools.partial(_ada_rmsnorm_kernel, eps=eps)

    out = pl.pallas_call(
        kernel,
        out_shape=jax.ShapeDtypeStruct((B, N, Dp), x.dtype),
        grid_spec=pltpu.PrefetchScalarGridSpec(
            num_scalar_prefetch=0,
            # n innermost: gamma/beta block index is constant across consecutive
            # steps, so their DMA is not re-issued; x tiles stay HBM-contiguous.
            grid=(B, n_tiles),
            in_specs=[
                pl.BlockSpec((1, block_n, Dp), lambda b, n: (b, n, 0)),  # x tile
                pl.BlockSpec((1, 1, Dp), lambda b, n: (b, 0, 0)),        # gamma (per batch)
                pl.BlockSpec((1, 1, Dp), lambda b, n: (b, 0, 0)),        # beta  (per batch)
            ],
            out_specs=pl.BlockSpec((1, block_n, Dp), lambda b, n: (b, n, 0)),
        ),
        compiler_params=pltpu.CompilerParams(
            dimension_semantics=("parallel", "parallel"),
            vmem_limit_bytes=vmem_limit,
        ),
    )(xp, gamma, beta)

    if Dp != D:
        out = out[:, :, :D]
    return out


if __name__ == "__main__":
    key = jax.random.PRNGKey(0)
    B, N, D = 2, 8, 32          # batch, seq, hidden (dim)
    C = D                        # cond_dim defaults to dim

    kx, kc = jax.random.split(key)
    x = jax.random.normal(kx, (B, N, D), dtype=jnp.float32)
    cond = jax.random.normal(kc, (B, C), dtype=jnp.float32)

    # Deterministic parameter init, matching the module's __init__:
    # to_gamma: weight = zeros, bias = ones ; to_beta: weight = zeros, bias = zeros
    wg = jnp.zeros((C, D), dtype=jnp.float32)   # (cond_dim, dim) == W^T of nn.Linear
    bg = jnp.ones((D,), dtype=jnp.float32)
    wb = jnp.zeros((C, D), dtype=jnp.float32)
    bb = jnp.zeros((D,), dtype=jnp.float32)

    out = adaptive_rmsnorm(x, cond, wg, bg, wb, bb)
    out = jax.block_until_ready(out)

    # Pure-JAX reference of the module's forward semantics.
    norm = jnp.sqrt(jnp.sum(x * x, axis=-1, keepdims=True))
    normed = x / jnp.maximum(norm, 1e-12) * (D ** 0.5)
    gamma_ref = (cond @ wg + bg)[:, None, :]
    beta_ref = (cond @ wb + bb)[:, None, :]
    ref = normed * gamma_ref + beta_ref
    assert out.shape == ref.shape
    assert jnp.allclose(out, ref, atol=1e-5, rtol=1e-5), "mismatch vs reference"

    print("KERNEL_OK")
</pallas_src>

<mosaic_0001>
module attributes {stable_mosaic.version = 11 : i64} {
  func.func @_ada_rmsnorm_kernel(%arg0: i32, %arg1: i32, %arg2: memref<1x8x128xf32, #tpu.memory_space<vmem>>, %arg3: memref<1x1x128xf32, #tpu.memory_space<vmem>>, %arg4: memref<1x1x128xf32, #tpu.memory_space<vmem>>, %arg5: memref<1x8x128xf32, #tpu.memory_space<vmem>>) attributes {dimension_semantics = [#tpu.dimension_semantics<parallel>, #tpu.dimension_semantics<parallel>], iteration_bounds = array<i64: 2, 1>, scalar_prefetch = 0 : i64, scratch_operands = 0 : i64, tpu.core_type = #tpu.core_type<tc>, window_params = [{transform_indices = @transform_0, window_bounds = array<i64: 1, 8, 128>}, {transform_indices = @transform_1, window_bounds = array<i64: 1, 1, 128>}, {transform_indices = @transform_2, window_bounds = array<i64: 1, 1, 128>}, {transform_indices = @transform_3, window_bounds = array<i64: 1, 8, 128>}]} {
    %c0 = arith.constant 0 : index
    %c0_0 = arith.constant 0 : index
    %c0_1 = arith.constant 0 : index
    %0 = vector.load %arg2[%c0, %c0_0, %c0_1] : memref<1x8x128xf32, #tpu.memory_space<vmem>>, vector<1x8x128xf32>
    %1 = arith.mulf %0, %0 : vector<1x8x128xf32>
    %cst = arith.constant dense<0.000000e+00> : vector<1x8xf32>
    %2 = vector.multi_reduction <add>, %1, %cst [2] : vector<1x8x128xf32> to vector<1x8xf32>
    %3 = vector.shape_cast %2 : vector<1x8xf32> to vector<1x8x1xf32>
    %cst_2 = arith.constant 1.000000e-24 : f32
    %4 = vector.broadcast %cst_2 : f32 to vector<1x8x1xf32>
    %5 = arith.maximumf %3, %4 : vector<1x8x1xf32>
    %6 = math.rsqrt %5 : vector<1x8x1xf32>
    %c0_3 = arith.constant 0 : index
    %c0_4 = arith.constant 0 : index
    %c0_5 = arith.constant 0 : index
    %7 = vector.load %arg3[%c0_3, %c0_4, %c0_5] : memref<1x1x128xf32, #tpu.memory_space<vmem>>, vector<1x1x128xf32>
    %c0_6 = arith.constant 0 : index
    %c0_7 = arith.constant 0 : index
    %c0_8 = arith.constant 0 : index
    %8 = vector.load %arg4[%c0_6, %c0_7, %c0_8] : memref<1x1x128xf32, #tpu.memory_space<vmem>>, vector<1x1x128xf32>
    %9 = vector.broadcast %6 : vector<1x8x1xf32> to vector<1x8x128xf32>
    %10 = arith.mulf %0, %9 : vector<1x8x128xf32>
    %11 = vector.broadcast %7 : vector<1x1x128xf32> to vector<1x8x128xf32>
    %12 = arith.mulf %10, %11 : vector<1x8x128xf32>
    %13 = vector.broadcast %8 : vector<1x1x128xf32> to vector<1x8x128xf32>
    %14 = arith.addf %12, %13 : vector<1x8x128xf32>
    %c0_9 = arith.constant 0 : index
    %c0_10 = arith.constant 0 : index
    %c0_11 = arith.constant 0 : index
    %15 = vector.load %arg5[%c0_9, %c0_10, %c0_11] : memref<1x8x128xf32, #tpu.memory_space<vmem>>, vector<1x8x128xf32>
    tpu.vector_store %arg5[%c0_9, %c0_10, %c0_11], %14 {strides = array<i32>} : memref<1x8x128xf32, #tpu.memory_space<vmem>>, vector<1x8x128xf32>,
    return
  }
  func.func @transform_0(%arg0: i32, %arg1: i32) -> (i32, i32, i32) {
    %c0_i32 = arith.constant 0 : i32
    %c0_i32_0 = arith.constant 0 : i32
    return %arg0, %arg1, %c0_i32 : i32, i32, i32
  }
  func.func @transform_1(%arg0: i32, %arg1: i32) -> (i32, i32, i32) {
    %c0_i32 = arith.constant 0 : i32
    %c0_i32_0 = arith.constant 0 : i32
    %c0_i32_1 = arith.constant 0 : i32
    return %arg0, %c0_i32, %c0_i32_0 : i32, i32, i32
  }
  func.func @transform_2(%arg0: i32, %arg1: i32) -> (i32, i32, i32) {
    %c0_i32 = arith.constant 0 : i32
    %c0_i32_0 = arith.constant 0 : i32
    %c0_i32_1 = arith.constant 0 : i32
    return %arg0, %c0_i32, %c0_i32_0 : i32, i32, i32
  }
  func.func @transform_3(%arg0: i32, %arg1: i32) -> (i32, i32, i32) {
    %c0_i32 = arith.constant 0 : i32
    %c0_i32_0 = arith.constant 0 : i32
    return %arg0, %arg1, %c0_i32 : i32, i32, i32
  }
}

</mosaic_0001>

<llo_original>
// kernel: tpu_custom_call.1
$region0: #{tpu_custom_call.1}
  #allocation0 [shape = 'u32[]', space=smem, size = 0x4, offset = 0x4, fixed_abs, tag = 'smem constant byte address 0x4 - core index']
  #allocation1 [shape = 'u32[144,128]{1,0:T(1,128)}', space=vmem, size = 0x12000, scoped, tag = 'internal scratch']
  %s0 = inlined_call_operand.hbm [shape: f32[2,8,128], index: 0, kind: input, shape index: {}]
  %s1 = inlined_call_operand.vmem [shape: f32[2,1,128], index: 1, kind: input, shape index: {}]
  %s2 = inlined_call_operand.vmem [shape: f32[2,1,128], index: 2, kind: input, shape index: {}]
  %s3 = inlined_call_operand.hbm [shape: f32[2,8,128], index: 3, kind: output, shape index: {}]
  %s4 = sld [smem:[#allocation0]]
  $region49: #{tpu_custom_call.1} parent=0
    _
  %s6 = ssub.s32 1, %s4
  %s7 = scalar_select 0, %s6, %s4
  $region1: #{tpu_custom_call.1} parent=0
    #allocation2 [shape = 'u8[8192]{0}', space=vmem, size = 0x2000, scoped, tag = 'input window, operand 0']
    #allocation3 [shape = 's32[2]{0}', space=sflag, size = 0x8, scoped, tag = 'scoped memory for tpu_custom_call.1']
    #allocation4 [shape = 's32[2]{0}', space=sflag, size = 0x8, scoped, tag = 'scoped memory for tpu_custom_call.1']
    #allocation5 [shape = 'u8[8192]{0}', space=vmem, size = 0x2000, scoped, tag = 'output window, operand 0']
    %8 = vsyncpa [#allocation3], 0
    %s9 = scalar_lea.sflag [#allocation3], 1
    %10 = vsyncpa %s9, 0
    %11 = vsyncpa [#allocation4], 0
    %s12 = scalar_lea.sflag [#allocation4], 1
    %13 = vsyncpa %s12, 0
    loop: start=0, step=1, limit=4
    $region2: #{tpu_custom_call.1} parent=1 // loop_pre_header
      _
    $region3: #{tpu_custom_call.1} parent=1 // loop_header
      %s15 = sphi 0, %s19
      %p16 = scmp.ge.s32.totalorder %s15, 4
      %s22 = sphi 0, %s34
      %s23 = sphi 0, %s30
      %s24 = sphi 0, %s22
      %s25 = sphi 0, %s23
      %s26 = sphi 0, %s24
      %s27 = sphi 0, %s25
      %s39 = sphi 0, %s41
      %s42 = sphi 0, %s39
      %s43 = sphi 0, %s42
      %s59 = sphi 0, %s43
      %s65 = sphi 0, %s67
      %s68 = sphi 0, %s65
      %s69 = sphi 0, %s68
      %s85 = sphi 0, %s69
      %s91 = sphi 0, %s93
      %s94 = sphi 0, %s91
      %s95 = sphi 0, %s94
      %s111 = sphi 0, %s95
      %s119 = sphi 0, %s121
      %s122 = sphi 0, %s119
      %s123 = sphi 0, %s122
      %s139 = sphi 0, %s123
    $region4: #{tpu_custom_call.1} parent=1 // loop_header_branch
      %18 = sbr.rel (%p16) target = $region8
    $region5: #{tpu_custom_call.1} parent=1 // loop_body
      %s20 = ssub.s32 %s15, 1
      %s21 = ssub.s32 %s15, 2
      %s28 = sadd.s32 1, %s23
      %p29 = scmp.ge.s32.totalorder %s28, 1
      %s30 = scalar_select %p29, 0, %s28
      %s31 = sadd.s32 1, %s22
      %s32 = scalar_select %p29, %s31, %s22
      %p33 = scmp.ge.s32.totalorder %s32, 2
      %s34 = scalar_select %p33, 0, %s32
      %s35 = ssub.s32 %s22, %s34
      %s36 = ssub.s32 %s23, %s30
      %s37 = sor.u32 %s35, %s36
      %p38 = scmp.eq.s32.totalorder %s37, 0
      %s40 = sadd.s32 %s39, 1
      %s41 = scalar_select %p38, %s39, %s40
      %p44 = pneg %p38
      %p45 = scmp.eq.s32.totalorder %s15, 1
      %p46 = por %p44, %p45
      %p47 = scmp.ne.s32.totalorder %s39, %s42
      %p48 = scmp.eq.s32.totalorder %s15, 0
      %p49 = por %p47, %p48
      %p50 = scmp.ne.s32.totalorder %s39, %s42
      %p51 = scmp.eq.s32.totalorder %s20, 1
      %p52 = por %p50, %p51
      %p53 = scmp.ne.s32.totalorder %s42, %s43
      %p54 = scmp.eq.s32.totalorder %s20, 0
      %p55 = por %p53, %p54
      %p56 = scmp.ne.s32.totalorder %s42, %s43
      %p57 = scmp.eq.s32.totalorder %s21, 1
      %p58 = por %p56, %p57
      %p60 = scmp.ne.s32.totalorder %s43, %s59
      %p61 = scmp.eq.s32.totalorder %s21, 0
      %p62 = por %p60, %p61
      %s63 = ssub.s32 %s22, %s34
      %p64 = scmp.eq.s32.totalorder %s63, 0
      %s66 = sadd.s32 %s65, 1
      %s67 = scalar_select %p64, %s65, %s66
      %p70 = pneg %p64
      %p71 = scmp.eq.s32.totalorder %s15, 1
      %p72 = por %p70, %p71
      %p73 = scmp.ne.s32.totalorder %s65, %s68
      %p74 = scmp.eq.s32.totalorder %s15, 0
      %p75 = por %p73, %p74
      %p76 = scmp.ne.s32.totalorder %s65, %s68
      %p77 = scmp.eq.s32.totalorder %s20, 1
      %p78 = por %p76, %p77
      %p79 = scmp.ne.s32.totalorder %s68, %s69
      %p80 = scmp.eq.s32.totalorder %s20, 0
      %p81 = por %p79, %p80
      %p82 = scmp.ne.s32.totalorder %s68, %s69
      %p83 = scmp.eq.s32.totalorder %s21, 1
      %p84 = por %p82, %p83
      %p86 = scmp.ne.s32.totalorder %s69, %s85
      %p87 = scmp.eq.s32.totalorder %s21, 0
      %p88 = por %p86, %p87
      %s89 = ssub.s32 %s22, %s34
      %p90 = scmp.eq.s32.totalorder %s89, 0
      %s92 = sadd.s32 %s91, 1
      %s93 = scalar_select %p90, %s91, %s92
      %p96 = pneg %p90
      %p97 = scmp.eq.s32.totalorder %s15, 1
      %p98 = por %p96, %p97
      %p99 = scmp.ne.s32.totalorder %s91, %s94
      %p100 = scmp.eq.s32.totalorder %s15, 0
      %p101 = por %p99, %p100
      %p102 = scmp.ne.s32.totalorder %s91, %s94
      %p103 = scmp.eq.s32.totalorder %s20, 1
      %p104 = por %p102, %p103
      %p105 = scmp.ne.s32.totalorder %s94, %s95
      %p106 = scmp.eq.s32.totalorder %s20, 0
      %p107 = por %p105, %p106
      %p108 = scmp.ne.s32.totalorder %s94, %s95
      %p109 = scmp.eq.s32.totalorder %s21, 1
      %p110 = por %p108, %p109
      %p112 = scmp.ne.s32.totalorder %s95, %s111
      %p113 = scmp.eq.s32.totalorder %s21, 0
      %p114 = por %p112, %p113
      %s115 = ssub.s32 %s22, %s34
      %s116 = ssub.s32 %s23, %s30
      %s117 = sor.u32 %s115, %s116
      %p118 = scmp.eq.s32.totalorder %s117, 0
      %s120 = sadd.s32 %s119, 1
      %s121 = scalar_select %p118, %s119, %s120
      %p124 = pneg %p118
      %p125 = scmp.eq.s32.totalorder %s15, 1
      %p126 = por %p124, %p125
      %p127 = scmp.ne.s32.totalorder %s119, %s122
      %p128 = scmp.eq.s32.totalorder %s15, 0
      %p129 = por %p127, %p128
      %p130 = scmp.ne.s32.totalorder %s119, %s122
      %p131 = scmp.eq.s32.totalorder %s20, 1
      %p132 = por %p130, %p131
      %p133 = scmp.ne.s32.totalorder %s122, %s123
      %p134 = scmp.eq.s32.totalorder %s20, 0
      %p135 = por %p133, %p134
      %p136 = scmp.ne.s32.totalorder %s122, %s123
      %p137 = scmp.eq.s32.totalorder %s21, 1
      %p138 = por %p136, %p137
      %p140 = scmp.ne.s32.totalorder %s123, %s139
      %p141 = scmp.eq.s32.totalorder %s21, 0
      %p142 = por %p140, %p141
      %p143 = scmp.le.s32.totalorder 1, %s15
      %p144 = scmp.lt.s32.totalorder %s15, 3
      %p145 = pnand %p143, %p144
      %p146 = pneg %p145
      // Predicated region
      $region9: #{tpu_custom_call.1} parent=5 // pred_check
        _
      $region10: #{tpu_custom_call.1} parent=5 // pred_check_branch
        %148 = sbr.rel (%p145) target = $region12
      $region11: #{tpu_custom_call.1} parent=5 // pred_region
        %s149 = ssub.s32 %s15, 1
      $region12: #{tpu_custom_call.1} parent=5 // pred_fallthru
        _
      %p150 = scmp.lt.s32.totalorder %s15, 2
      // Predicated region
      $region13: #{tpu_custom_call.1} parent=5 // pred_check
        %p151 = pneg %p150
      $region14: #{tpu_custom_call.1} parent=5 // pred_check_branch
        %153 = sbr.rel (%p151) target = $region16
      $region15: #{tpu_custom_call.1} parent=5 // pred_region
        // Predicated region
        $region17: #{tpu_custom_call.1} parent=15 // pred_check
          %p154 = pneg %p49
        $region18: #{tpu_custom_call.1} parent=15 // pred_check_branch
          %156 = sbr.rel (%p154) target = $region20
        $region19: #{tpu_custom_call.1} parent=15 // pred_region
          %s157 = sand.u32 %s39, 1
          %s158 = scalar_lea.sflag [#allocation3], %s157
          %s159 = sand.u32 %s39, 1
          %s160 = smul.addr %s159, 8
          %s161 = scalar_lea.vmem [#allocation2], %s160
          %s163 = ssub.s32 128, 128
          %164 = vsyncadd %s158, %s163
          %s165 = sadd.s32 %s23, %s22
          %s166 = smul.addr %s165, 128
          %s167 = scalar_lea.hbm %s0, %s166
          %s169 = sshll.u32 %s161, 4
          %s170 = int_to_ptr.vmem [resolvable:$true] %s169
          %172 = dma.hbm_to_vmem [thread:$0]  %s167, 128, %s170, %s158
        $region20: #{tpu_custom_call.1} parent=15 // pred_fallthru
          _
        // Predicated region
        $region21: #{tpu_custom_call.1} parent=15 // pred_check
          %p173 = pneg %p75
        $region22: #{tpu_custom_call.1} parent=15 // pred_check_branch
          %175 = sbr.rel (%p173) target = $region24
        $region23: #{tpu_custom_call.1} parent=15 // pred_region
          %p176 = scmp.lt.s32.totalorder %s22, 1
          %s177 = scalar_select %p176, %s22, 1
          %s178 = scalar_lea.vmem %s1, %s177
        $region24: #{tpu_custom_call.1} parent=15 // pred_fallthru
          _
        // Predicated region
        $region25: #{tpu_custom_call.1} parent=15 // pred_check
          %p179 = pneg %p101
        $region26: #{tpu_custom_call.1} parent=15 // pred_check_branch
          %181 = sbr.rel (%p179) target = $region28
        $region27: #{tpu_custom_call.1} parent=15 // pred_region
          %p182 = scmp.lt.s32.totalorder %s22, 1
          %s183 = scalar_select %p182, %s22, 1
          %s184 = scalar_lea.vmem %s2, %s183
        $region28: #{tpu_custom_call.1} parent=15 // pred_fallthru
          _
      $region16: #{tpu_custom_call.1} parent=5 // pred_fallthru
        _
      %p185 = scmp.le.s32.totalorder 1, %s15
      %p186 = scmp.lt.s32.totalorder %s15, 3
      %p187 = pnand %p185, %p186
      %p188 = pneg %p187
      // Predicated region
      $region29: #{tpu_custom_call.1} parent=5 // pred_check
        _
      $region30: #{tpu_custom_call.1} parent=5 // pred_check_branch
        %190 = sbr.rel (%p187) target = $region32
      $region31: #{tpu_custom_call.1} parent=5 // pred_region
        %s191 = ssub.s32 %s15, 1
        %s192 = sand.u32 %s42, 1
        %s193 = scalar_lea.sflag [#allocation3], %s192
        %s194 = sand.u32 %s42, 1
        %s195 = smul.addr %s194, 8
        %s196 = scalar_lea.vmem [#allocation2], %s195
        // Predicated region
        $region33: #{tpu_custom_call.1} parent=31 // pred_check
          %p197 = pneg %p55
        $region34: #{tpu_custom_call.1} parent=31 // pred_check_branch
          %199 = sbr.rel (%p197) target = $region36
        $region35: #{tpu_custom_call.1} parent=31 // pred_region
          %200 = dma.done %s193, 128
        $region36: #{tpu_custom_call.1} parent=31 // pred_fallthru
          _
        %s201 = sand.u32 %s42, 1
        %s202 = scalar_lea.sflag [#allocation3], %s201
        %s203 = sand.u32 %s42, 1
        %s204 = smul.addr %s203, 8
        %s205 = scalar_lea.vmem [#allocation2], %s204
        %p206 = pneg %p55
        %p207 = pneg %p52
        %p208 = scmp.lt.s32.totalorder %s24, 1
        %s209 = scalar_select %p208, %s24, 1
        %s210 = scalar_lea.vmem %s1, %s209
        %p211 = pneg %p81
        %p212 = pneg %p78
        %p213 = scmp.lt.s32.totalorder %s24, 1
        %s214 = scalar_select %p213, %s24, 1
        %s215 = scalar_lea.vmem %s2, %s214
        %p216 = pneg %p107
        %p217 = pneg %p104
        %p218 = pneg %p135
        %p219 = pneg %p132
        %s220 = sand.u32 %s122, 1
        %s221 = scalar_lea.sflag [#allocation4], %s220
        %s222 = sand.u32 %s122, 1
        %s223 = smul.addr %s222, 8
        %s224 = scalar_lea.vmem [#allocation5], %s223
        %p225 = scmp.lt.s32.totalorder %s24, 1
        %s226 = scalar_select %p225, %s24, 1
        %s227 = scalar_lea.vmem %s1, %s226
        %p228 = scmp.lt.s32.totalorder %s24, 1
        %s229 = scalar_select %p228, %s24, 1
        %s230 = scalar_lea.vmem %s2, %s229
        %v231 = vld [vmem:[%s196] sm:$0xff]
        %v232 = vmul.f32 %v231, %v231
        %233 = vadd.xlane.f32.xlu0 %v232
        %v234 = vpop.xlane.xlu0 %233
        %v235 = vmax.f32 %v234, 1e-24
        %v236 = vrsqrt.pop %v235
        %v237 = vld [vmem:[%s227] sm:$0x1]
        %v238 = vld [vmem:[%s230] sm:$0x1]
        %v239 = vmul.f32 %v231, %v236
        %v241 = vlaneseq
        %v242 = vshrl.u32 %v241, 7
        %v243 = vsub.s32 0, %v242
        %v244 = vrot.slane %v237, %v243
        %v246 = vmul.f32 %v239, %v244
        %v248 = vlaneseq
        %v249 = vshrl.u32 %v248, 7
        %v250 = vsub.s32 0, %v249
        %v251 = vrot.slane %v238, %v250
        %v253 = vadd.f32 %v246, %v251
        %254 = vst [vmem:[%s224] sm:$0xff] %v253
        %s255 = sand.u32 %s122, 1
        %s256 = scalar_lea.sflag [#allocation4], %s255
        %s257 = sand.u32 %s122, 1
        %s258 = smul.addr %s257, 8
        %s259 = scalar_lea.vmem [#allocation5], %s258
        // Predicated region
        $region37: #{tpu_custom_call.1} parent=31 // pred_check
          %p260 = pneg %p132
        $region38: #{tpu_custom_call.1} parent=31 // pred_check_branch
          %262 = sbr.rel (%p260) target = $region40
        $region39: #{tpu_custom_call.1} parent=31 // pred_region
          %s264 = ssub.s32 128, 128
          %265 = vsyncadd %s256, %s264
          %s266 = sadd.s32 %s25, %s24
          %s267 = smul.addr %s266, 128
          %s268 = scalar_lea.hbm %s3, %s267
          %s270 = sshll.u32 %s259, 4
          %s271 = int_to_ptr.vmem [resolvable:$true] %s270
          %273 = dma.vmem_to_hbm [thread:$0]  %s271, 128, %s268, %s256
        $region40: #{tpu_custom_call.1} parent=31 // pred_fallthru
          _
      $region32: #{tpu_custom_call.1} parent=5 // pred_fallthru
        _
      %p274 = scmp.le.s32.totalorder 2, %s15
      // Predicated region
      $region41: #{tpu_custom_call.1} parent=5 // pred_check
        %p275 = pneg %p274
      $region42: #{tpu_custom_call.1} parent=5 // pred_check_branch
        %277 = sbr.rel (%p275) target = $region44
      $region43: #{tpu_custom_call.1} parent=5 // pred_region
        %s278 = ssub.s32 %s15, 2
        // Predicated region
        $region45: #{tpu_custom_call.1} parent=43 // pred_check
          %p279 = pneg %p138
        $region46: #{tpu_custom_call.1} parent=43 // pred_check_branch
          %281 = sbr.rel (%p279) target = $region48
        $region47: #{tpu_custom_call.1} parent=43 // pred_region
          %s282 = sand.u32 %s123, 1
          %s283 = scalar_lea.sflag [#allocation4], %s282
          %s284 = sand.u32 %s123, 1
          %s285 = smul.addr %s284, 8
          %s286 = scalar_lea.vmem [#allocation5], %s285
          %287 = dma.done %s283, 128
        $region48: #{tpu_custom_call.1} parent=43 // pred_fallthru
          _
      $region44: #{tpu_custom_call.1} parent=5 // pred_fallthru
        _
    $region6: #{tpu_custom_call.1} parent=1 // loop_footer
      %s19 = sadd.s32 1, %s15
    $region7: #{tpu_custom_call.1} parent=1 // loop_footer_branch
      %14 = sbr.rel target = $region3
    $region8: #{tpu_custom_call.1} parent=1 // loop_exit
      _
    %288 = vsyncpa [#allocation3], 1
    %s289 = scalar_lea.sflag [#allocation3], 1
    %290 = vsyncpa %s289, 1
    %291 = vsyncpa [#allocation4], 1
    %s292 = scalar_lea.sflag [#allocation4], 1
    %293 = vsyncpa %s292, 1

</llo_original>
